<compile_context>
chip_gen: v7x
topology: tpu7x:2x2x1
jax: 0.10.0
libtpu: 0.0.40
codegen_flags: <defaults>
</compile_context>

<pallas_src>
import functools

import jax
import jax.numpy as jnp
from jax.experimental import pallas as pl
from jax.experimental.pallas import tpu as pltpu


def _gcn_layer_kernel(x_ref, wt_ref, adj_ref, bias_ref, o_ref, y_ref, *, relu):
    """Fused GCNConv layer: out_tile = relu?(adj_tile @ (x @ W^T) + bias).

    grid = (N // tm,) over output node-row tiles; runs sequentially
    ("arbitrary") because y_ref is produced once at step 0 and reused.
    """

    @pl.when(pl.program_id(0) == 0)
    def _():
        # Feature transform once; y stays resident in VMEM across all steps.
        y_ref[...] = jnp.dot(
            x_ref[...], wt_ref[...], preferred_element_type=jnp.float32
        ).astype(y_ref.dtype)

    # Neighborhood aggregation for this row tile (bf16 MXU, f32 accumulate).
    h = jnp.dot(adj_ref[...], y_ref[...], preferred_element_type=jnp.float32)
    h = h + bias_ref[...]  # (tm, F_out) + (1, F_out) broadcast, f32 epilogue
    if relu:
        h = jnp.maximum(h, 0.0)
    o_ref[...] = h.astype(o_ref.dtype)


def gcn_layer(x, adj, wt, bias, *, relu, out_dtype, tm=256):
    """One fused GCNConv(normalize=False) layer as a single pallas_call.

    x:    [N, F_in]   node features
    adj:  [N, N]      dense adjacency (row i aggregates neighbors of node i)
    wt:   [F_in, F_out]  pre-transposed linear weight (= torch W^T)
    bias: [F_out]
    """
    N, F_in = x.shape
    F_in2, F_out = wt.shape
    assert F_in == F_in2 and adj.shape == (N, N)
    tm = min(tm, N)
    # TODO(synk): add padding / edge-tile handling for N, F not multiples of the tiles.
    assert N % tm == 0 and tm % 8 == 0
    assert F_in % 128 == 0 and F_out % 128 == 0 and N % 128 == 0

    # bf16 MXU operands (f32 accumulation happens inside the kernel).
    x_bf = x.astype(jnp.bfloat16)
    adj_bf = adj.astype(jnp.bfloat16)
    wt_bf = wt.astype(jnp.bfloat16)
    bias2d = bias.reshape(1, F_out).astype(jnp.float32)

    kernel = functools.partial(_gcn_layer_kernel, relu=relu)

    return pl.pallas_call(
        kernel,
        out_shape=jax.ShapeDtypeStruct((N, F_out), out_dtype),
        grid_spec=pltpu.PrefetchScalarGridSpec(
            num_scalar_prefetch=0,
            grid=(N // tm,),
            in_specs=[
                pl.BlockSpec((N, F_in), lambda i: (0, 0)),      # x: resident
                pl.BlockSpec((F_in, F_out), lambda i: (0, 0)),  # W^T: resident
                pl.BlockSpec((tm, N), lambda i: (i, 0)),        # adj row tile
                pl.BlockSpec((1, F_out), lambda i: (0, 0)),     # bias: resident
            ],
            out_specs=pl.BlockSpec((tm, F_out), lambda i: (i, 0)),
            scratch_shapes=[pltpu.VMEM((N, F_out), jnp.bfloat16)],  # y scratch
        ),
        compiler_params=pltpu.CompilerParams(
            # "arbitrary": the y scratch is produced at step 0 and reused, so
            # the node-tile axis must run sequentially on one core.
            # TODO(synk): for v7x 2-TC utilization on large graphs, recompute
            # y per tile and mark this axis "parallel" instead.
            dimension_semantics=("arbitrary",),
        ),
    )(x_bf, wt_bf, adj_bf, bias2d)


def gcn_forward(x, adj, params):
    """params: list of (wt [F_in, F_out] pre-transposed, bias [F_out]) per layer."""
    n_layers = len(params)
    adj_bf = adj.astype(jnp.bfloat16)
    h = x.astype(jnp.bfloat16)
    for li, (wt, b) in enumerate(params):
        last = li == n_layers - 1
        out_dtype = jnp.float32 if last else jnp.bfloat16
        h = gcn_layer(h, adj_bf, wt, b, relu=not last, out_dtype=out_dtype)
        # TODO(synk): F.dropout is identity in eval mode (training=False); a
        # training-mode dropout would use pltpu.prng_seed + prng_random_bits in-kernel.
    return h
    # TODO(synk): for real sparse graphs, replace the dense adj @ y aggregation
    # with a CSR gather (PrefetchScalarGridSpec scalar-prefetched row offsets).


def init_gcn_params(key, in_channels, hidden_channels, out_channels, num_layers):
    layer_dims = [(in_channels, hidden_channels)]
    for _ in range(num_layers - 2):
        layer_dims.append((hidden_channels, hidden_channels))
    layer_dims.append((hidden_channels, out_channels))

    params = []
    for fin, fout in layer_dims:
        key, kw, kb = jax.random.split(key, 3)
        # Glorot-style init, stored pre-transposed as W^T: [F_in, F_out].
        scale = jnp.sqrt(6.0 / (fin + fout))
        wt = jax.random.uniform(kw, (fin, fout), jnp.float32, -scale, scale)
        # Nonzero bias so the bias-add path is actually exercised by the check.
        b = jax.random.uniform(kb, (fout,), jnp.float32, -0.1, 0.1)
        params.append((wt, b))
    return params


if __name__ == "__main__":
    key = jax.random.PRNGKey(0)
    k_x, k_adj, k_p = jax.random.split(key, 3)

    # Small synthetic graph: 256 nodes, 128 input features.
    N = 256
    in_channels, hidden_channels, out_channels = 128, 128, 128
    num_layers = 3
    dropout = 0.5  # inference -> no-op

    x = jax.random.normal(k_x, (N, in_channels), jnp.float32)

    # Dense adjacency standing in for adj_t (normalize=False), with self loops.
    adj = (jax.random.uniform(k_adj, (N, N)) < 0.05).astype(jnp.float32)
    adj = adj + jnp.eye(N, dtype=jnp.float32)

    params = init_gcn_params(k_p, in_channels, hidden_channels, out_channels, num_layers)

    out = gcn_forward(x, adj, params)
    jax.block_until_ready(out)

    # Reference in plain JAX with matching bf16-operand / f32-accumulate math.
    adj_bf = adj.astype(jnp.bfloat16)
    ref = x.astype(jnp.bfloat16)
    for li, (wt, b) in enumerate(params):
        y = jnp.dot(
            ref, wt.astype(jnp.bfloat16), preferred_element_type=jnp.float32
        ).astype(jnp.bfloat16)
        h = jnp.dot(adj_bf, y, preferred_element_type=jnp.float32) + b
        if li != len(params) - 1:
            ref = jnp.maximum(h, 0.0).astype(jnp.bfloat16)
        else:
            ref = h

    assert out.shape == (N, out_channels)
    assert out.dtype == jnp.float32
    assert jnp.allclose(out, ref.astype(jnp.float32), atol=5e-2, rtol=5e-2)

    print("KERNEL_OK")
</pallas_src>

<mosaic_0001>
module attributes {stable_mosaic.version = 11 : i64} {
  func.func @_gcn_layer_kernel(%arg0: i32, %arg1: memref<256x128xbf16, #tpu.memory_space<vmem>>, %arg2: memref<128x128xbf16, #tpu.memory_space<vmem>>, %arg3: memref<256x256xbf16, #tpu.memory_space<vmem>>, %arg4: memref<1x128xf32, #tpu.memory_space<vmem>>, %arg5: memref<256x128xbf16, #tpu.memory_space<vmem>>, %arg6: memref<256x128xbf16, #tpu.memory_space<vmem>>) attributes {dimension_semantics = [#tpu.dimension_semantics<arbitrary>], iteration_bounds = array<i64: 1>, scalar_prefetch = 0 : i64, scratch_operands = 1 : i64, tpu.core_type = #tpu.core_type<tc>, window_params = [{pipeline_mode = #tpu.pipeline_mode<synchronous>, transform_indices = @transform_0, window_bounds = array<i64: 256, 128>}, {pipeline_mode = #tpu.pipeline_mode<synchronous>, transform_indices = @transform_1, window_bounds = array<i64: 128, 128>}, {transform_indices = @transform_2, window_bounds = array<i64: 256, 256>}, {pipeline_mode = #tpu.pipeline_mode<synchronous>, transform_indices = @transform_3, window_bounds = array<i64: 1, 128>}, {transform_indices = @transform_4, window_bounds = array<i64: 256, 128>}]} {
    %c0_i32 = arith.constant 0 : i32
    %0 = arith.cmpi eq, %arg0, %c0_i32 : i32
    %1 = arith.extui %0 : i1 to i32
    %c0_i32_0 = arith.constant 0 : i32
    %2 = arith.cmpi ne, %1, %c0_i32_0 : i32
    scf.if %2 {
      %c0_9 = arith.constant 0 : index
      %c0_10 = arith.constant 0 : index
      %13 = vector.load %arg1[%c0_9, %c0_10] : memref<256x128xbf16, #tpu.memory_space<vmem>>, vector<256x128xbf16>
      %c0_11 = arith.constant 0 : index
      %c0_12 = arith.constant 0 : index
      %14 = vector.load %arg2[%c0_11, %c0_12] : memref<128x128xbf16, #tpu.memory_space<vmem>>, vector<128x128xbf16>
      %cst_13 = arith.constant dense<0.000000e+00> : vector<256x128xf32>
      %15 = tpu.matmul %13, %14, %cst_13 {dimension_numbers = #tpu.dot_dimension_numbers<[1], [0], [0], [1], [0, 0, 1, 1], [], []>} : vector<256x128xbf16>, vector<128x128xbf16>, vector<256x128xf32> -> vector<256x128xf32>
      %16 = arith.truncf %15 : vector<256x128xf32> to vector<256x128xbf16>
      %c0_14 = arith.constant 0 : index
      %c0_15 = arith.constant 0 : index
      %17 = vector.load %arg6[%c0_14, %c0_15] : memref<256x128xbf16, #tpu.memory_space<vmem>>, vector<256x128xbf16>
      tpu.vector_store %arg6[%c0_14, %c0_15], %16 {strides = array<i32>} : memref<256x128xbf16, #tpu.memory_space<vmem>>, vector<256x128xbf16>,
    } else {
    }
    %c0 = arith.constant 0 : index
    %c0_1 = arith.constant 0 : index
    %3 = vector.load %arg3[%c0, %c0_1] : memref<256x256xbf16, #tpu.memory_space<vmem>>, vector<256x256xbf16>
    %c0_2 = arith.constant 0 : index
    %c0_3 = arith.constant 0 : index
    %4 = vector.load %arg6[%c0_2, %c0_3] : memref<256x128xbf16, #tpu.memory_space<vmem>>, vector<256x128xbf16>
    %cst = arith.constant dense<0.000000e+00> : vector<256x128xf32>
    %5 = tpu.matmul %3, %4, %cst {dimension_numbers = #tpu.dot_dimension_numbers<[1], [0], [0], [1], [0, 0, 1, 1], [], []>} : vector<256x256xbf16>, vector<256x128xbf16>, vector<256x128xf32> -> vector<256x128xf32>
    %c0_4 = arith.constant 0 : index
    %c0_5 = arith.constant 0 : index
    %6 = vector.load %arg4[%c0_4, %c0_5] : memref<1x128xf32, #tpu.memory_space<vmem>>, vector<1x128xf32>
    %7 = vector.broadcast %6 : vector<1x128xf32> to vector<256x128xf32>
    %8 = arith.addf %5, %7 : vector<256x128xf32>
    %cst_6 = arith.constant 0.000000e+00 : f32
    %9 = vector.broadcast %cst_6 : f32 to vector<256x128xf32>
    %10 = arith.maximumf %8, %9 : vector<256x128xf32>
    %11 = arith.truncf %10 : vector<256x128xf32> to vector<256x128xbf16>
    %c0_7 = arith.constant 0 : index
    %c0_8 = arith.constant 0 : index
    %12 = vector.load %arg5[%c0_7, %c0_8] : memref<256x128xbf16, #tpu.memory_space<vmem>>, vector<256x128xbf16>
    tpu.vector_store %arg5[%c0_7, %c0_8], %11 {strides = array<i32>} : memref<256x128xbf16, #tpu.memory_space<vmem>>, vector<256x128xbf16>,
    return
  }
  func.func @transform_0(%arg0: i32) -> (i32, i32) {
    %c0_i32 = arith.constant 0 : i32
    %c0_i32_0 = arith.constant 0 : i32
    %c0_i32_1 = arith.constant 0 : i32
    return %c0_i32, %c0_i32_0 : i32, i32
  }
  func.func @transform_1(%arg0: i32) -> (i32, i32) {
    %c0_i32 = arith.constant 0 : i32
    %c0_i32_0 = arith.constant 0 : i32
    %c0_i32_1 = arith.constant 0 : i32
    return %c0_i32, %c0_i32_0 : i32, i32
  }
  func.func @transform_2(%arg0: i32) -> (i32, i32) {
    %c0_i32 = arith.constant 0 : i32
    %c0_i32_0 = arith.constant 0 : i32
    return %arg0, %c0_i32 : i32, i32
  }
  func.func @transform_3(%arg0: i32) -> (i32, i32) {
    %c0_i32 = arith.constant 0 : i32
    %c0_i32_0 = arith.constant 0 : i32
    %c0_i32_1 = arith.constant 0 : i32
    return %c0_i32, %c0_i32_0 : i32, i32
  }
  func.func @transform_4(%arg0: i32) -> (i32, i32) {
    %c0_i32 = arith.constant 0 : i32
    %c0_i32_0 = arith.constant 0 : i32
    return %arg0, %c0_i32 : i32, i32
  }
}

</mosaic_0001>

<llo_original>
// kernel: tpu_custom_call.1
$region0: #{tpu_custom_call.1}
  #allocation0 [shape = 'u32[]', space=smem, size = 0x4, offset = 0x4, fixed_abs, tag = 'smem constant byte address 0x4 - core index']
  #allocation1 [shape = 'u32[144,128]{1,0:T(1,128)}', space=vmem, size = 0x12000, scoped, tag = 'internal scratch']
  #allocation2 [shape = 'bf16[256,128]{1,0:T(16,128)(2,1)}', space=vmem, size = 0x10000, scoped, tag = 'scratch operand']
  %s0 = inlined_call_operand.hbm [shape: bf16[256,128], index: 0, kind: input, shape index: {}]
  %s1 = inlined_call_operand.hbm [shape: bf16[128,128], index: 1, kind: input, shape index: {}]
  %s2 = inlined_call_operand.hbm [shape: bf16[256,256], index: 2, kind: input, shape index: {}]
  %s3 = inlined_call_operand.vmem [shape: f32[1,128], index: 3, kind: input, shape index: {}]
  %s4 = inlined_call_operand.hbm [shape: bf16[256,128], index: 4, kind: output, shape index: {}]
  %s5 = sld [smem:[#allocation0]]
  $region42: #{tpu_custom_call.1} parent=0
    _
  %s7 = ssub.s32 1, %s5
  %s8 = scalar_select 0, %s7, %s5
  $region1: #{tpu_custom_call.1} parent=0
    #allocation3 [shape = 'u8[65536]{0}', space=vmem, size = 0x10000, scoped, tag = 'input window, operand 0, single buffered']
    #allocation4 [shape = 's32[1]{0}', space=sflag, size = 0x4, scoped, tag = 'scoped memory for tpu_custom_call.1']
    #allocation5 [shape = 's32[1]{0}', space=sflag, size = 0x4, scoped, tag = 'scoped memory for tpu_custom_call.1']
    #allocation6 [shape = 'u8[32768]{0}', space=vmem, size = 0x8000, scoped, tag = 'input window, operand 1, single buffered']
    #allocation7 [shape = 's32[1]{0}', space=sflag, size = 0x4, scoped, tag = 'scoped memory for tpu_custom_call.1']
    #allocation8 [shape = 'u8[131072]{0}', space=vmem, size = 0x20000, scoped, tag = 'input window, operand 2, single buffered']
    #allocation9 [shape = 'u8[65536]{0}', space=vmem, size = 0x10000, scoped, tag = 'output window, operand 0, single buffered']
    %9 = vsyncpa [#allocation4], 0
    %10 = vsyncpa [#allocation7], 0
    %11 = vsyncpa [#allocation5], 0
    // Predicated region
    $region2: #{tpu_custom_call.1} parent=1 // pred_check
      _
    $region3: #{tpu_custom_call.1} parent=1 // pred_check_branch
      %13 = sbr.rel (0) target = $region5
    $region4: #{tpu_custom_call.1} parent=1 // pred_region
      %s15 = ssub.s32 2048, 2048
      %16 = vsyncadd [#allocation4], %s15
      %s17 = sshll.u32 [#allocation3], 4
      %s18 = int_to_ptr.vmem [resolvable:$true] %s17
      %23 = dma.hbm_to_vmem [thread:$0]  %s0, 2048, %s18, [#allocation4], 64, 64, 4
    $region5: #{tpu_custom_call.1} parent=1 // pred_fallthru
      _
    // Predicated region
    $region6: #{tpu_custom_call.1} parent=1 // pred_check
      _
    $region7: #{tpu_custom_call.1} parent=1 // pred_check_branch
      %25 = sbr.rel (0) target = $region9
    $region8: #{tpu_custom_call.1} parent=1 // pred_region
      %s27 = ssub.s32 1024, 1024
      %28 = vsyncadd [#allocation7], %s27
      %s29 = sshll.u32 [#allocation6], 4
      %s30 = int_to_ptr.vmem [resolvable:$true] %s29
      %35 = dma.hbm_to_vmem [thread:$0]  %s1, 1024, %s30, [#allocation7], 64, 64, 4
    $region9: #{tpu_custom_call.1} parent=1 // pred_fallthru
      _
    // Predicated region
    $region10: #{tpu_custom_call.1} parent=1 // pred_check
      _
    $region11: #{tpu_custom_call.1} parent=1 // pred_check_branch
      %37 = sbr.rel (0) target = $region13
    $region12: #{tpu_custom_call.1} parent=1 // pred_region
      %s39 = ssub.s32 4096, 4096
      %40 = vsyncadd [#allocation7], %s39
      %s41 = sshll.u32 [#allocation8], 4
      %s42 = int_to_ptr.vmem [resolvable:$true] %s41
      %47 = dma.hbm_to_vmem [thread:$0]  %s2, 4096, %s42, [#allocation7], 128, 128, 8
    $region13: #{tpu_custom_call.1} parent=1 // pred_fallthru
      _
    // Predicated region
    $region14: #{tpu_custom_call.1} parent=1 // pred_check
      _
    $region15: #{tpu_custom_call.1} parent=1 // pred_check_branch
      %49 = sbr.rel (0) target = $region17
    $region16: #{tpu_custom_call.1} parent=1 // pred_region
      _
    $region17: #{tpu_custom_call.1} parent=1 // pred_fallthru
      _
    // Predicated region
    $region18: #{tpu_custom_call.1} parent=1 // pred_check
      _
    $region19: #{tpu_custom_call.1} parent=1 // pred_check_branch
      %51 = sbr.rel (0) target = $region21
    $region20: #{tpu_custom_call.1} parent=1 // pred_region
      %52 = dma.done [#allocation4], 2048
    $region21: #{tpu_custom_call.1} parent=1 // pred_fallthru
      _
    // Predicated region
    $region22: #{tpu_custom_call.1} parent=1 // pred_check
      _
    $region23: #{tpu_custom_call.1} parent=1 // pred_check_branch
      %54 = sbr.rel (0) target = $region25
    $region24: #{tpu_custom_call.1} parent=1 // pred_region
      %55 = dma.done [#allocation7], 1024
    $region25: #{tpu_custom_call.1} parent=1 // pred_fallthru
      _
    // Predicated region
    $region26: #{tpu_custom_call.1} parent=1 // pred_check
      _
    $region27: #{tpu_custom_call.1} parent=1 // pred_check_branch
      %57 = sbr.rel (0) target = $region29
    $region28: #{tpu_custom_call.1} parent=1 // pred_region
      %58 = dma.done [#allocation7], 4096
    $region29: #{tpu_custom_call.1} parent=1 // pred_fallthru
      _
    %p60 = scmp.eq.s32.totalorder 0, 0
    // Predicated region
    $region30: #{tpu_custom_call.1} parent=1 // pred_check
      %p61 = pneg %p60
    $region31: #{tpu_custom_call.1} parent=1 // pred_check_branch
      %63 = sbr.rel (%p61) target = $region33
    $region32: #{tpu_custom_call.1} parent=1 // pred_region
      %v64 = vld [vmem:[#allocation3] sm:$0xf]
      %v65 = vld [vmem:[#allocation3 + $0x4] sm:$0xf]
      %v66 = vld [vmem:[#allocation3 + $0x8] sm:$0xf]
      %v67 = vld [vmem:[#allocation3 + $0xc] sm:$0xf]
      %v68 = vld [vmem:[#allocation3 + $0x10] sm:$0xf]
      %v69 = vld [vmem:[#allocation3 + $0x14] sm:$0xf]
      %v70 = vld [vmem:[#allocation3 + $0x18] sm:$0xf]
      %v71 = vld [vmem:[#allocation3 + $0x1c] sm:$0xf]
      %v72 = vld [vmem:[#allocation3 + $0x20] sm:$0xf]
      %v73 = vld [vmem:[#allocation3 + $0x24] sm:$0xf]
      %v74 = vld [vmem:[#allocation3 + $0x28] sm:$0xf]
      %v75 = vld [vmem:[#allocation3 + $0x2c] sm:$0xf]
      %v76 = vld [vmem:[#allocation3 + $0x30] sm:$0xf]
      %v77 = vld [vmem:[#allocation3 + $0x34] sm:$0xf]
      %v78 = vld [vmem:[#allocation3 + $0x38] sm:$0xf]
      %v79 = vld [vmem:[#allocation3 + $0x3c] sm:$0xf]
      %v80 = vld [vmem:[#allocation3 + $0x40] sm:$0xf]
      %v81 = vld [vmem:[#allocation3 + $0x44] sm:$0xf]
      %v82 = vld [vmem:[#allocation3 + $0x48] sm:$0xf]
      %v83 = vld [vmem:[#allocation3 + $0x4c] sm:$0xf]
      %v84 = vld [vmem:[#allocation3 + $0x50] sm:$0xf]
      %v85 = vld [vmem:[#allocation3 + $0x54] sm:$0xf]
      %v86 = vld [vmem:[#allocation3 + $0x58] sm:$0xf]
      %v87 = vld [vmem:[#allocation3 + $0x5c] sm:$0xf]
      %v88 = vld [vmem:[#allocation3 + $0x60] sm:$0xf]
      %v89 = vld [vmem:[#allocation3 + $0x64] sm:$0xf]
      %v90 = vld [vmem:[#allocation3 + $0x68] sm:$0xf]
      %v91 = vld [vmem:[#allocation3 + $0x6c] sm:$0xf]
      %v92 = vld [vmem:[#allocation3 + $0x70] sm:$0xf]
      %v93 = vld [vmem:[#allocation3 + $0x74] sm:$0xf]
      %v94 = vld [vmem:[#allocation3 + $0x78] sm:$0xf]
      %v95 = vld [vmem:[#allocation3 + $0x7c] sm:$0xf]
      %v96 = vld [vmem:[#allocation6] sm:$0xf]
      %v97 = vld [vmem:[#allocation6 + $0x4] sm:$0xf]
      %v98 = vld [vmem:[#allocation6 + $0x8] sm:$0xf]
      %v99 = vld [vmem:[#allocation6 + $0xc] sm:$0xf]
      %v100 = vld [vmem:[#allocation6 + $0x10] sm:$0xf]
      %v101 = vld [vmem:[#allocation6 + $0x14] sm:$0xf]
      %v102 = vld [vmem:[#allocation6 + $0x18] sm:$0xf]
      %v103 = vld [vmem:[#allocation6 + $0x1c] sm:$0xf]
      %v104 = vld [vmem:[#allocation6 + $0x20] sm:$0xf]
      %v105 = vld [vmem:[#allocation6 + $0x24] sm:$0xf]
      %v106 = vld [vmem:[#allocation6 + $0x28] sm:$0xf]
      %v107 = vld [vmem:[#allocation6 + $0x2c] sm:$0xf]
      %v108 = vld [vmem:[#allocation6 + $0x30] sm:$0xf]
      %v109 = vld [vmem:[#allocation6 + $0x34] sm:$0xf]
      %v110 = vld [vmem:[#allocation6 + $0x38] sm:$0xf]
      %v111 = vld [vmem:[#allocation6 + $0x3c] sm:$0xf]
      %v144 = vunpack.c.l.b16 %v64
      %v145 = vunpack.c.l.b16 %v65
      %v146 = vunpack.c.l.b16 %v66
      %v147 = vunpack.c.l.b16 %v67
      %v148 = vunpack.c.l.b16 %v68
      %v149 = vunpack.c.l.b16 %v69
      %v150 = vunpack.c.l.b16 %v70
      %v151 = vunpack.c.l.b16 %v71
      %v152 = vunpack.c.l.b16 %v72
      %v153 = vunpack.c.l.b16 %v73
      %v154 = vunpack.c.l.b16 %v74
      %v155 = vunpack.c.l.b16 %v75
      %v156 = vunpack.c.l.b16 %v76
      %v157 = vunpack.c.l.b16 %v77
      %v158 = vunpack.c.l.b16 %v78
      %v159 = vunpack.c.l.b16 %v79
      %v160 = vunpack.c.l.b16 %v80
      %v161 = vunpack.c.l.b16 %v81
      %v162 = vunpack.c.l.b16 %v82
      %v163 = vunpack.c.l.b16 %v83
      %v164 = vunpack.c.l.b16 %v84
      %v165 = vunpack.c.l.b16 %v85
      %v166 = vunpack.c.l.b16 %v86
      %v167 = vunpack.c.l.b16 %v87
      %v168 = vunpack.c.l.b16 %v88
      %v169 = vunpack.c.l.b16 %v89
      %v170 = vunpack.c.l.b16 %v90
      %v171 = vunpack.c.l.b16 %v91
      %v172 = vunpack.c.l.b16 %v92
      %v173 = vunpack.c.l.b16 %v93
      %v174 = vunpack.c.l.b16 %v94
      %v175 = vunpack.c.l.b16 %v95
      %v176 = vpack.c.b16 %v145, %v144
      %v177 = vpack.c.b16 %v147, %v146
      %v178 = vpack.c.b16 %v149, %v148
      %v179 = vpack.c.b16 %v151, %v150
      %v180 = vpack.c.b16 %v153, %v152
      %v181 = vpack.c.b16 %v155, %v154
      %v182 = vpack.c.b16 %v157, %v156
      %v183 = vpack.c.b16 %v159, %v158
      %v184 = vpack.c.b16 %v161, %v160
      %v185 = vpack.c.b16 %v163, %v162
      %v186 = vpack.c.b16 %v165, %v164
      %v187 = vpack.c.b16 %v167, %v166
      %v188 = vpack.c.b16 %v169, %v168
      %v189 = vpack.c.b16 %v171, %v170
      %v190 = vpack.c.b16 %v173, %v172
      %v191 = vpack.c.b16 %v175, %v174
      %v224 = vunpack.c.l.b16 %v96
      %v225 = vunpack.c.l.b16 %v97
      %v226 = vunpack.c.l.b16 %v98
      %v227 = vunpack.c.l.b16 %v99
      %v228 = vunpack.c.l.b16 %v100
      %v229 = vunpack.c.l.b16 %v101
      %v230 = vunpack.c.l.b16 %v102
      %v231 = vunpack.c.l.b16 %v103
      %v232 = vunpack.c.l.b16 %v104
      %v233 = vunpack.c.l.b16 %v105
      %v234 = vunpack.c.l.b16 %v106
      %v235 = vunpack.c.l.b16 %v107
      %v236 = vunpack.c.l.b16 %v108
      %v237 = vunpack.c.l.b16 %v109
      %v238 = vunpack.c.l.b16 %v110
      %v239 = vunpack.c.l.b16 %v111
      %v240 = vpack.c.b16 %v225, %v224
      %v241 = vpack.c.b16 %v227, %v226
      %v242 = vpack.c.b16 %v229, %v228
      %v243 = vpack.c.b16 %v231, %v230
      %v244 = vpack.c.b16 %v233, %v232
      %v245 = vpack.c.b16 %v235, %v234
      %v246 = vpack.c.b16 %v237, %v236
      %v247 = vpack.c.b16 %v239, %v238
      %256 = vmatprep.subr.bf16.mxu0 0
      %257 = vmatpush1.bf16.msra.mxu0 %v240
      %258 = vmatprep.subr.bf16.mxu0 0
      %259 = vmatpush1.bf16.msra.mxu0 %v241
      %260 = vmatprep.subr.bf16.mxu0 0
      %261 = vmatpush1.bf16.msra.mxu0 %v242
      %262 = vmatprep.subr.bf16.mxu0 0
      %263 = vmatpush1.bf16.msra.mxu0 %v243
      %264 = vmatprep.subr.bf16.mxu0 0
      %265 = vmatpush1.bf16.msra.mxu0 %v244
      %266 = vmatprep.subr.bf16.mxu0 0
      %267 = vmatpush1.bf16.msra.mxu0 %v245
      %268 = vmatprep.subr.bf16.mxu0 0
      %269 = vmatpush1.bf16.msra.mxu0 %v246
      %270 = vmatprep.subr.bf16.mxu0 0
      %271 = vmatpush1.bf16.msra.mxu0 %v247
      %272 = vmatprep.subr.bf16.mxu0 0
      %273 = vmatpush1.bf16.msra.mxu0 0
      %274 = vmatprep.subr.bf16.mxu0 0
      %275 = vmatpush1.bf16.msra.mxu0 0
      %276 = vmatprep.subr.bf16.mxu0 0
      %277 = vmatpush1.bf16.msra.mxu0 0
      %278 = vmatprep.subr.bf16.mxu0 0
      %279 = vmatpush1.bf16.msra.mxu0 0
      %280 = vmatprep.subr.bf16.mxu0 0
      %281 = vmatpush1.bf16.msra.mxu0 0
      %282 = vmatprep.subr.bf16.mxu0 0
      %283 = vmatpush1.bf16.msra.mxu0 0
      %284 = vmatprep.subr.bf16.mxu0 0
      %285 = vmatpush1.bf16.msra.mxu0 0
      %286 = vmatprep.subr.bf16.mxu0 0
      %287 = vmatpush1.bf16.msra.mxu0 0
      %288 = vmatprep.mubr.bf16.mxu0 0
      %289 = vmatmul.mubr.bf16.gmra.mrb[0].mxu0 %v176
      %v290 = vpop.f32.mrb[0].mxu0
      %v291 = vadd.f32 0.0, %v290
      %v292 = vpop.f32.mrb[0].mxu0
      %v293 = vpop.f32.mrb[0].mxu0
      %v294 = vadd.f32 0.0, %v293
      %v295 = vpop.f32.mrb[0].mxu0
      %296 = vmatprep.mubr.bf16.mxu0 0
      %297 = vmatmul.mubr.bf16.gmra.mrb[0].mxu0 %v177
      %v298 = vpop.f32.mrb[0].mxu0
      %v299 = vadd.f32 0.0, %v298
      %v300 = vpop.f32.mrb[0].mxu0
      %v301 = vpop.f32.mrb[0].mxu0
      %v302 = vadd.f32 0.0, %v301
      %v303 = vpop.f32.mrb[0].mxu0
      %304 = vmatprep.mubr.bf16.mxu0 0
      %305 = vmatmul.mubr.bf16.gmra.mrb[0].mxu0 %v178
      %v306 = vpop.f32.mrb[0].mxu0
      %v307 = vadd.f32 0.0, %v306
      %v308 = vpop.f32.mrb[0].mxu0
      %v309 = vpop.f32.mrb[0].mxu0
      %v310 = vadd.f32 0.0, %v309
      %v311 = vpop.f32.mrb[0].mxu0
      %312 = vmatprep.mubr.bf16.mxu0 0
      %313 = vmatmul.mubr.bf16.gmra.mrb[0].mxu0 %v179
      %v314 = vpop.f32.mrb[0].mxu0
      %v315 = vadd.f32 0.0, %v314
      %v316 = vpop.f32.mrb[0].mxu0
      %v317 = vpop.f32.mrb[0].mxu0
      %v318 = vadd.f32 0.0, %v317
      %v319 = vpop.f32.mrb[0].mxu0
      %320 = vmatprep.mubr.bf16.mxu0 0
      %321 = vmatmul.mubr.bf16.gmra.mrb[0].mxu0 %v180
      %v322 = vpop.f32.mrb[0].mxu0
      %v323 = vadd.f32 0.0, %v322
      %v324 = vpop.f32.mrb[0].mxu0
      %v325 = vpop.f32.mrb[0].mxu0
      %v326 = vadd.f32 0.0, %v325
      %v327 = vpop.f32.mrb[0].mxu0
      %328 = vmatprep.mubr.bf16.mxu0 0
      %329 = vmatmul.mubr.bf16.gmra.mrb[0].mxu0 %v181
      %v330 = vpop.f32.mrb[0].mxu0
      %v331 = vadd.f32 0.0, %v330
      %v332 = vpop.f32.mrb[0].mxu0
      %v333 = vpop.f32.mrb[0].mxu0
      %v334 = vadd.f32 0.0, %v333
      %v335 = vpop.f32.mrb[0].mxu0
      %336 = vmatprep.mubr.bf16.mxu0 0
      %337 = vmatmul.mubr.bf16.gmra.mrb[0].mxu0 %v182
      %v338 = vpop.f32.mrb[0].mxu0
      %v339 = vadd.f32 0.0, %v338
      %v340 = vpop.f32.mrb[0].mxu0
      %v341 = vpop.f32.mrb[0].mxu0
      %v342 = vadd.f32 0.0, %v341
      %v343 = vpop.f32.mrb[0].mxu0
      %344 = vmatprep.mubr.bf16.mxu0 0
      %345 = vmatmul.mubr.bf16.gmra.mrb[0].mxu0 %v183
      %v346 = vpop.f32.mrb[0].mxu0
      %v347 = vadd.f32 0.0, %v346
      %v348 = vpop.f32.mrb[0].mxu0
      %v349 = vpop.f32.mrb[0].mxu0
      %v350 = vadd.f32 0.0, %v349
      %v351 = vpop.f32.mrb[0].mxu0
      %352 = vmatprep.mubr.bf16.mxu0 0
      %353 = vmatmul.mubr.bf16.gmra.mrb[0].mxu0 %v184
      %v354 = vpop.f32.mrb[0].mxu0
      %v355 = vadd.f32 0.0, %v354
      %v356 = vpop.f32.mrb[0].mxu0
      %v357 = vpop.f32.mrb[0].mxu0
      %v358 = vadd.f32 0.0, %v357
      %v359 = vpop.f32.mrb[0].mxu0
      %360 = vmatprep.mubr.bf16.mxu0 0
      %361 = vmatmul.mubr.bf16.gmra.mrb[0].mxu0 %v185
      %v362 = vpop.f32.mrb[0].mxu0
      %v363 = vadd.f32 0.0, %v362
      %v364 = vpop.f32.mrb[0].mxu0
      %v365 = vpop.f32.mrb[0].mxu0
      %v366 = vadd.f32 0.0, %v365
      %v367 = vpop.f32.mrb[0].mxu0
      %368 = vmatprep.mubr.bf16.mxu0 0
      %369 = vmatmul.mubr.bf16.gmra.mrb[0].mxu0 %v186
      %v370 = vpop.f32.mrb[0].mxu0
      %v371 = vadd.f32 0.0, %v370
      %v372 = vpop.f32.mrb[0].mxu0
      %v373 = vpop.f32.mrb[0].mxu0
      %v374 = vadd.f32 0.0, %v373
      %v375 = vpop.f32.mrb[0].mxu0
      %376 = vmatprep.mubr.bf16.mxu0 0
      %377 = vmatmul.mubr.bf16.gmra.mrb[0].mxu0 %v187
      %v378 = vpop.f32.mrb[0].mxu0
      %v379 = vadd.f32 0.0, %v378
      %v380 = vpop.f32.mrb[0].mxu0
      %v381 = vpop.f32.mrb[0].mxu0
      %v382 = vadd.f32 0.0, %v381
      %v383 = vpop.f32.mrb[0].mxu0
      %384 = vmatprep.mubr.bf16.mxu0 0
      %385 = vmatmul.mubr.bf16.gmra.mrb[0].mxu0 %v188
      %v386 = vpop.f32.mrb[0].mxu0
      %v387 = vadd.f32 0.0, %v386
      %v388 = vpop.f32.mrb[0].mxu0
      %v389 = vpop.f32.mrb[0].mxu0
      %v390 = vadd.f32 0.0, %v389
      %v391 = vpop.f32.mrb[0].mxu0
      %392 = vmatprep.mubr.bf16.mxu0 0
      %393 = vmatmul.mubr.bf16.gmra.mrb[0].mxu0 %v189
      %v394 = vpop.f32.mrb[0].mxu0
      %v395 = vadd.f32 0.0, %v394
      %v396 = vpop.f32.mrb[0].mxu0
      %v397 = vpop.f32.mrb[0].mxu0
      %v398 = vadd.f32 0.0, %v397
      %v399 = vpop.f32.mrb[0].mxu0
      %400 = vmatprep.mubr.bf16.mxu0 0
      %401 = vmatmul.mubr.bf16.gmra.mrb[0].mxu0 %v190
      %v402 = vpop.f32.mrb[0].mxu0
      %v403 = vadd.f32 0.0, %v402
      %v404 = vpop.f32.mrb[0].mxu0
      %v405 = vpop.f32.mrb[0].mxu0
      %v406 = vadd.f32 0.0, %v405
      %v407 = vpop.f32.mrb[0].mxu0
      %408 = vmatprep.mubr.bf16.mxu0 0
      %409 = vmatmul.mubr.bf16.gmra.mrb[0].mxu0 %v191
      %v410 = vpop.f32.mrb[0].mxu0
      %v411 = vadd.f32 0.0, %v410
      %v412 = vpop.f32.mrb[0].mxu0
      %v413 = vpop.f32.mrb[0].mxu0
      %v414 = vadd.f32 0.0, %v413
      %v415 = vpop.f32.mrb[0].mxu0
      %416 = vdwg.mxu0
      %v417 = vpack.c.bf16 %v294, %v291
      %v418 = vpack.c.bf16 %v302, %v299
      %v419 = vpack.c.bf16 %v310, %v307
      %v420 = vpack.c.bf16 %v318, %v315
      %v421 = vpack.c.bf16 %v326, %v323
      %v422 = vpack.c.bf16 %v334, %v331
      %v423 = vpack.c.bf16 %v342, %v339
      %v424 = vpack.c.bf16 %v350, %v347
      %v425 = vpack.c.bf16 %v358, %v355
      %v426 = vpack.c.bf16 %v366, %v363
      %v427 = vpack.c.bf16 %v374, %v371
      %v428 = vpack.c.bf16 %v382, %v379
      %v429 = vpack.c.bf16 %v390, %v387
      %v430 = vpack.c.bf16 %v398, %v395
      %v431 = vpack.c.bf16 %v406, %v403
      %v432 = vpack.c.bf16 %v414, %v411
      %433 = vst [vmem:[#allocation2] sm:$0xff] %v417
      %434 = vst [vmem:[#allocation2 + $0x8] sm:$0xff] %v418
      %435 = vst [vmem:[#allocation2 + $0x10] sm:$0xff] %v419
      %436 = vst [vmem:[#allocation2 + $0x18] sm:$0xff] %v420
      %437 = vst [vmem:[#allocation2 + $0x20] sm:$0xff] %v421
      %438 = vst [vmem:[#allocation2 + $0x28] sm:$0xff] %v422
      %439 = vst [vmem:[#allocation2 + $0x30] sm:$0xff] %v423
      %440 = vst [vmem:[#allocation2 + $0x38] sm:$0xff] %v424
      %441 = vst [vmem:[#allocation2 + $0x40] sm:$0xff] %v425
      %442 = vst [vmem:[#allocation2 + $0x48] sm:$0xff] %v426
      %443 = vst [vmem:[#allocation2 + $0x50] sm:$0xff] %v427
      %444 = vst [vmem:[#allocation2 + $0x58] sm:$0xff] %v428
      %445 = vst [vmem:[#allocation2 + $0x60] sm:$0xff] %v429
      %446 = vst [vmem:[#allocation2 + $0x68] sm:$0xff] %v430
      %447 = vst [vmem:[#allocation2 + $0x70] sm:$0xff] %v431
      %448 = vst [vmem:[#allocation2 + $0x78] sm:$0xff] %v432
    $region33: #{tpu_custom_call.1} parent=1 // pred_fallthru
      _
    %v449 = vld [vmem:[#allocation8] sm:$0xff]
    %v450 = vld [vmem:[#allocation8 + $0x8] sm:$0xff]
    %v451 = vld [vmem:[#allocation8 + $0x10] sm:$0xff]
    %v452 = vld [vmem:[#allocation8 + $0x18] sm:$0xff]
    %v453 = vld [vmem:[#allocation8 + $0x20] sm:$0xff]
    %v454 = vld [vmem:[#allocation8 + $0x28] sm:$0xff]
    %v455 = vld [vmem:[#allocation8 + $0x30] sm:$0xff]
    %v456 = vld [vmem:[#allocation8 + $0x38] sm:$0xff]
    %v457 = vld [vmem:[#allocation8 + $0x40] sm:$0xff]
    %v458 = vld [vmem:[#allocation8 + $0x48] sm:$0xff]
    %v459 = vld [vmem:[#allocation8 + $0x50] sm:$0xff]
    %v460 = vld [vmem:[#allocation8 + $0x58] sm:$0xff]
    %v461 = vld [vmem:[#allocation8 + $0x60] sm:$0xff]
    %v462 = vld [vmem:[#allocation8 + $0x68] sm:$0xff]
    %v463 = vld [vmem:[#allocation8 + $0x70] sm:$0xff]
    %v464 = vld [vmem:[#allocation8 + $0x78] sm:$0xff]
    %v465 = vld [vmem:[#allocation8 + $0x80] sm:$0xff]
    %v466 = vld [vmem:[#allocation8 + $0x88] sm:$0xff]
    %v467 = vld [vmem:[#allocation8 + $0x90] sm:$0xff]
    %v468 = vld [vmem:[#allocation8 + $0x98] sm:$0xff]
    %v469 = vld [vmem:[#allocation8 + $0xa0] sm:$0xff]
    %v470 = vld [vmem:[#allocation8 + $0xa8] sm:$0xff]
    %v471 = vld [vmem:[#allocation8 + $0xb0] sm:$0xff]
    %v472 = vld [vmem:[#allocation8 + $0xb8] sm:$0xff]
    %v473 = vld [vmem:[#allocation8 + $0xc0] sm:$0xff]
    %v474 = vld [vmem:[#allocation8 + $0xc8] sm:$0xff]
    %v475 = vld [vmem:[#allocation8 + $0xd0] sm:$0xff]
    %v476 = vld [vmem:[#allocation8 + $0xd8] sm:$0xff]
    %v477 = vld [vmem:[#allocation8 + $0xe0] sm:$0xff]
    %v478 = vld [vmem:[#allocation8 + $0xe8] sm:$0xff]
    %v479 = vld [vmem:[#allocation8 + $0xf0] sm:$0xff]
    %v480 = vld [vmem:[#allocation8 + $0xf8] sm:$0xff]
    %v481 = vld [vmem:[#allocation2] sm:$0xff]
    %v482 = vld [vmem:[#allocation2 + $0x8] sm:$0xff]
    %v483 = vld [vmem:[#allocation2 + $0x10] sm:$0xff]
    %v484 = vld [vmem:[#allocation2 + $0x18] sm:$0xff]
    %v485 = vld [vmem:[#allocation2 + $0x20] sm:$0xff]
    %v486 = vld [vmem:[#allocation2 + $0x28] sm:$0xff]
    %v487 = vld [vmem:[#allocation2 + $0x30] sm:$0xff]
    %v488 = vld [vmem:[#allocation2 + $0x38] sm:$0xff]
    %v489 = vld [vmem:[#allocation2 + $0x40] sm:$0xff]
    %v490 = vld [vmem:[#allocation2 + $0x48] sm:$0xff]
    %v491 = vld [vmem:[#allocation2 + $0x50] sm:$0xff]
    %v492 = vld [vmem:[#allocation2 + $0x58] sm:$0xff]
    %v493 = vld [vmem:[#allocation2 + $0x60] sm:$0xff]
    %v494 = vld [vmem:[#allocation2 + $0x68] sm:$0xff]
    %v495 = vld [vmem:[#allocation2 + $0x70] sm:$0xff]
    %v496 = vld [vmem:[#allocation2 + $0x78] sm:$0xff]
    %v497 = vld [vmem:[%s3] sm:$0x1]
    %v499 = vlaneseq
    %v500 = vshrl.u32 %v499, 7
    %v501 = vsub.s32 0, %v500
    %v502 = vrot.slane %v497, %v501
    %v536 = vunpack.c.l.b16 %v449
    %v537 = vunpack.c.h.b16 %v449
    %v538 = vunpack.c.l.b16 %v450
    %v539 = vunpack.c.h.b16 %v450
    %v540 = vunpack.c.l.b16 %v451
    %v541 = vunpack.c.h.b16 %v451
    %v542 = vunpack.c.l.b16 %v452
    %v543 = vunpack.c.h.b16 %v452
    %v544 = vunpack.c.l.b16 %v453
    %v545 = vunpack.c.h.b16 %v453
    %v546 = vunpack.c.l.b16 %v454
    %v547 = vunpack.c.h.b16 %v454
    %v548 = vunpack.c.l.b16 %v455
    %v549 = vunpack.c.h.b16 %v455
    %v550 = vunpack.c.l.b16 %v456
    %v551 = vunpack.c.h.b16 %v456
    %v552 = vunpack.c.l.b16 %v457
    %v553 = vunpack.c.h.b16 %v457
    %v554 = vunpack.c.l.b16 %v458
    %v555 = vunpack.c.h.b16 %v458
    %v556 = vunpack.c.l.b16 %v459
    %v557 = vunpack.c.h.b16 %v459
    %v558 = vunpack.c.l.b16 %v460
    %v559 = vunpack.c.h.b16 %v460
    %v560 = vunpack.c.l.b16 %v461
    %v561 = vunpack.c.h.b16 %v461
    %v562 = vunpack.c.l.b16 %v462
    %v563 = vunpack.c.h.b16 %v462
    %v564 = vunpack.c.l.b16 %v463
    %v565 = vunpack.c.h.b16 %v463
    %v566 = vunpack.c.l.b16 %v464
    %v567 = vunpack.c.h.b16 %v464
    %v568 = vunpack.c.l.b16 %v465
    %v569 = vunpack.c.h.b16 %v465
    %v570 = vunpack.c.l.b16 %v466
    %v571 = vunpack.c.h.b16 %v466
    %v572 = vunpack.c.l.b16 %v467
    %v573 = vunpack.c.h.b16 %v467
    %v574 = vunpack.c.l.b16 %v468
    %v575 = vunpack.c.h.b16 %v468
    %v576 = vunpack.c.l.b16 %v469
    %v577 = vunpack.c.h.b16 %v469
    %v578 = vunpack.c.l.b16 %v470
    %v579 = vunpack.c.h.b16 %v470
    %v580 = vunpack.c.l.b16 %v471
    %v581 = vunpack.c.h.b16 %v471
    %v582 = vunpack.c.l.b16 %v472
    %v583 = vunpack.c.h.b16 %v472
    %v584 = vunpack.c.l.b16 %v473
    %v585 = vunpack.c.h.b16 %v473
    %v586 = vunpack.c.l.b16 %v474
    %v587 = vunpack.c.h.b16 %v474
    %v588 = vunpack.c.l.b16 %v475
    %v589 = vunpack.c.h.b16 %v475
    %v590 = vunpack.c.l.b16 %v476
    %v591 = vunpack.c.h.b16 %v476
    %v592 = vunpack.c.l.b16 %v477
    %v593 = vunpack.c.h.b16 %v477
    %v594 = vunpack.c.l.b16 %v478
    %v595 = vunpack.c.h.b16 %v478
    %v596 = vunpack.c.l.b16 %v479
    %v597 = vunpack.c.h.b16 %v479
    %v598 = vunpack.c.l.b16 %v480
    %v599 = vunpack.c.h.b16 %v480
    %v600 = vpack.c.b16 %v538, %v536
    %v601 = vpack.c.b16 %v539, %v537
    %v602 = vpack.c.b16 %v542, %v540
    %v603 = vpack.c.b16 %v543, %v541
    %v604 = vpack.c.b16 %v546, %v544
    %v605 = vpack.c.b16 %v547, %v545
    %v606 = vpack.c.b16 %v550, %v548
    %v607 = vpack.c.b16 %v551, %v549
    %v608 = vpack.c.b16 %v554, %v552
    %v609 = vpack.c.b16 %v555, %v553
    %v610 = vpack.c.b16 %v558, %v556
    %v611 = vpack.c.b16 %v559, %v557
    %v612 = vpack.c.b16 %v562, %v560
    %v613 = vpack.c.b16 %v563, %v561
    %v614 = vpack.c.b16 %v566, %v564
    %v615 = vpack.c.b16 %v567, %v565
    %v616 = vpack.c.b16 %v570, %v568
    %v617 = vpack.c.b16 %v571, %v569
    %v618 = vpack.c.b16 %v574, %v572
    %v619 = vpack.c.b16 %v575, %v573
    %v620 = vpack.c.b16 %v578, %v576
    %v621 = vpack.c.b16 %v579, %v577
    %v622 = vpack.c.b16 %v582, %v580
    %v623 = vpack.c.b16 %v583, %v581
    %v624 = vpack.c.b16 %v586, %v584
    %v625 = vpack.c.b16 %v587, %v585
    %v626 = vpack.c.b16 %v590, %v588
    %v627 = vpack.c.b16 %v591, %v589
    %v628 = vpack.c.b16 %v594, %v592
    %v629 = vpack.c.b16 %v595, %v593
    %v630 = vpack.c.b16 %v598, %v596
    %v631 = vpack.c.b16 %v599, %v597
    %664 = vmatprep.subr.bf16.mxu0 0
    %665 = vmatpush1.bf16.msra.mxu0 %v481
    %666 = vmatprep.subr.bf16.mxu0 0
    %667 = vmatpush1.bf16.msra.mxu0 %v482
    %668 = vmatprep.subr.bf16.mxu0 0
    %669 = vmatpush1.bf16.msra.mxu0 %v483
    %670 = vmatprep.subr.bf16.mxu0 0
    %671 = vmatpush1.bf16.msra.mxu0 %v484
    %672 = vmatprep.subr.bf16.mxu0 0
    %673 = vmatpush1.bf16.msra.mxu0 %v485
    %674 = vmatprep.subr.bf16.mxu0 0
    %675 = vmatpush1.bf16.msra.mxu0 %v486
    %676 = vmatprep.subr.bf16.mxu0 0
    %677 = vmatpush1.bf16.msra.mxu0 %v487
    %678 = vmatprep.subr.bf16.mxu0 0
    %679 = vmatpush1.bf16.msra.mxu0 %v488
    %680 = vmatprep.subr.bf16.mxu0 0
    %681 = vmatpush1.bf16.msra.mxu0 %v489
    %682 = vmatprep.subr.bf16.mxu0 0
    %683 = vmatpush1.bf16.msra.mxu0 %v490
    %684 = vmatprep.subr.bf16.mxu0 0
    %685 = vmatpush1.bf16.msra.mxu0 %v491
    %686 = vmatprep.subr.bf16.mxu0 0
    %687 = vmatpush1.bf16.msra.mxu0 %v492
    %688 = vmatprep.subr.bf16.mxu0 0
    %689 = vmatpush1.bf16.msra.mxu0 %v493
    %690 = vmatprep.subr.bf16.mxu0 0
    %691 = vmatpush1.bf16.msra.mxu0 %v494
    %692 = vmatprep.subr.bf16.mxu0 0
    %693 = vmatpush1.bf16.msra.mxu0 %v495
    %694 = vmatprep.subr.bf16.mxu0 0
    %695 = vmatpush1.bf16.msra.mxu0 %v496
    %696 = vmatprep.mubr.bf16.mxu0 %v601
    %697 = vmatmul.mubr.bf16.gmra.mrb[0].mxu0 %v600
    %v698 = vpop.f32.mrb[0].mxu0
    %v699 = vadd.f32 %v502, %v698
    %v700 = vpop.f32.mrb[0].mxu0
    %v701 = vpop.f32.mrb[0].mxu0
    %v702 = vadd.f32 %v502, %v701
    %v703 = vpop.f32.mrb[0].mxu0
    %704 = vmatprep.mubr.bf16.mxu0 %v603
    %705 = vmatmul.mubr.bf16.gmra.mrb[0].mxu0 %v602
    %v706 = vpop.f32.mrb[0].mxu0
    %v707 = vadd.f32 %v502, %v706
    %v708 = vpop.f32.mrb[0].mxu0
    %v709 = vpop.f32.mrb[0].mxu0
    %v710 = vadd.f32 %v502, %v709
    %v711 = vpop.f32.mrb[0].mxu0
    %712 = vmatprep.mubr.bf16.mxu0 %v605
    %713 = vmatmul.mubr.bf16.gmra.mrb[0].mxu0 %v604
    %v714 = vpop.f32.mrb[0].mxu0
    %v715 = vadd.f32 %v502, %v714
    %v716 = vpop.f32.mrb[0].mxu0
    %v717 = vpop.f32.mrb[0].mxu0
    %v718 = vadd.f32 %v502, %v717
    %v719 = vpop.f32.mrb[0].mxu0
    %720 = vmatprep.mubr.bf16.mxu0 %v607
    %721 = vmatmul.mubr.bf16.gmra.mrb[0].mxu0 %v606
    %v722 = vpop.f32.mrb[0].mxu0
    %v723 = vadd.f32 %v502, %v722
    %v724 = vpop.f32.mrb[0].mxu0
    %v725 = vpop.f32.mrb[0].mxu0
    %v726 = vadd.f32 %v502, %v725
    %v727 = vpop.f32.mrb[0].mxu0
    %728 = vmatprep.mubr.bf16.mxu0 %v609
    %729 = vmatmul.mubr.bf16.gmra.mrb[0].mxu0 %v608
    %v730 = vpop.f32.mrb[0].mxu0
    %v731 = vadd.f32 %v502, %v730
    %v732 = vpop.f32.mrb[0].mxu0
    %v733 = vpop.f32.mrb[0].mxu0
    %v734 = vadd.f32 %v502, %v733
    %v735 = vpop.f32.mrb[0].mxu0
    %736 = vmatprep.mubr.bf16.mxu0 %v611
    %737 = vmatmul.mubr.bf16.gmra.mrb[0].mxu0 %v610
    %v738 = vpop.f32.mrb[0].mxu0
    %v739 = vadd.f32 %v502, %v738
    %v740 = vpop.f32.mrb[0].mxu0
    %v741 = vpop.f32.mrb[0].mxu0
    %v742 = vadd.f32 %v502, %v741
    %v743 = vpop.f32.mrb[0].mxu0
    %744 = vmatprep.mubr.bf16.mxu0 %v613
    %745 = vmatmul.mubr.bf16.gmra.mrb[0].mxu0 %v612
    %v746 = vpop.f32.mrb[0].mxu0
    %v747 = vadd.f32 %v502, %v746
    %v748 = vpop.f32.mrb[0].mxu0
    %v749 = vpop.f32.mrb[0].mxu0
    %v750 = vadd.f32 %v502, %v749
    %v751 = vpop.f32.mrb[0].mxu0
    %752 = vmatprep.mubr.bf16.mxu0 %v615
    %753 = vmatmul.mubr.bf16.gmra.mrb[0].mxu0 %v614
    %v754 = vpop.f32.mrb[0].mxu0
    %v755 = vadd.f32 %v502, %v754
    %v756 = vpop.f32.mrb[0].mxu0
    %v757 = vpop.f32.mrb[0].mxu0
    %v758 = vadd.f32 %v502, %v757
    %v759 = vpop.f32.mrb[0].mxu0
    %760 = vmatprep.mubr.bf16.mxu0 %v617
    %761 = vmatmul.mubr.bf16.gmra.mrb[0].mxu0 %v616
    %v762 = vpop.f32.mrb[0].mxu0
    %v763 = vadd.f32 %v502, %v762
    %v764 = vpop.f32.mrb[0].mxu0
    %v765 = vpop.f32.mrb[0].mxu0
    %v766 = vadd.f32 %v502, %v765
    %v767 = vpop.f32.mrb[0].mxu0
    %768 = vmatprep.mubr.bf16.mxu0 %v619
    %769 = vmatmul.mubr.bf16.gmra.mrb[0].mxu0 %v618
    %v770 = vpop.f32.mrb[0].mxu0
    %v771 = vadd.f32 %v502, %v770
    %v772 = vpop.f32.mrb[0].mxu0
    %v773 = vpop.f32.mrb[0].mxu0
    %v774 = vadd.f32 %v502, %v773
    %v775 = vpop.f32.mrb[0].mxu0
    %776 = vmatprep.mubr.bf16.mxu0 %v621
    %777 = vmatmul.mubr.bf16.gmra.mrb[0].mxu0 %v620
    %v778 = vpop.f32.mrb[0].mxu0
    %v779 = vadd.f32 %v502, %v778
    %v780 = vpop.f32.mrb[0].mxu0
    %v781 = vpop.f32.mrb[0].mxu0
    %v782 = vadd.f32 %v502, %v781
    %v783 = vpop.f32.mrb[0].mxu0
    %784 = vmatprep.mubr.bf16.mxu0 %v623
    %785 = vmatmul.mubr.bf16.gmra.mrb[0].mxu0 %v622
    %v786 = vpop.f32.mrb[0].mxu0
    %v787 = vadd.f32 %v502, %v786
    %v788 = vpop.f32.mrb[0].mxu0
    %v789 = vpop.f32.mrb[0].mxu0
    %v790 = vadd.f32 %v502, %v789
    %v791 = vpop.f32.mrb[0].mxu0
    %792 = vmatprep.mubr.bf16.mxu0 %v625
    %793 = vmatmul.mubr.bf16.gmra.mrb[0].mxu0 %v624
    %v794 = vpop.f32.mrb[0].mxu0
    %v795 = vadd.f32 %v502, %v794
    %v796 = vpop.f32.mrb[0].mxu0
    %v797 = vpop.f32.mrb[0].mxu0
    %v798 = vadd.f32 %v502, %v797
    %v799 = vpop.f32.mrb[0].mxu0
    %800 = vmatprep.mubr.bf16.mxu0 %v627
    %801 = vmatmul.mubr.bf16.gmra.mrb[0].mxu0 %v626
    %v802 = vpop.f32.mrb[0].mxu0
    %v803 = vadd.f32 %v502, %v802
    %v804 = vpop.f32.mrb[0].mxu0
    %v805 = vpop.f32.mrb[0].mxu0
    %v806 = vadd.f32 %v502, %v805
    %v807 = vpop.f32.mrb[0].mxu0
    %808 = vmatprep.mubr.bf16.mxu0 %v629
    %809 = vmatmul.mubr.bf16.gmra.mrb[0].mxu0 %v628
    %v810 = vpop.f32.mrb[0].mxu0
    %v811 = vadd.f32 %v502, %v810
    %v812 = vpop.f32.mrb[0].mxu0
    %v813 = vpop.f32.mrb[0].mxu0
    %v814 = vadd.f32 %v502, %v813
    %v815 = vpop.f32.mrb[0].mxu0
    %816 = vmatprep.mubr.bf16.mxu0 %v631
    %817 = vmatmul.mubr.bf16.gmra.mrb[0].mxu0 %v630
    %v818 = vpop.f32.mrb[0].mxu0
    %v819 = vadd.f32 %v502, %v818
    %v820 = vpop.f32.mrb[0].mxu0
    %v821 = vpop.f32.mrb[0].mxu0
    %v822 = vadd.f32 %v502, %v821
    %v823 = vpop.f32.mrb[0].mxu0
    %824 = vdwg.mxu0
    %v825 = vmax.f32 %v699, 0.0
    %v826 = vmax.f32 %v702, 0.0
    %v827 = vmax.f32 %v707, 0.0
    %v828 = vmax.f32 %v710, 0.0
    %v829 = vmax.f32 %v715, 0.0
    %v830 = vmax.f32 %v718, 0.0
    %v831 = vmax.f32 %v723, 0.0
    %v832 = vmax.f32 %v726, 0.0
    %v833 = vmax.f32 %v731, 0.0
    %v834 = vmax.f32 %v734, 0.0
    %v835 = vmax.f32 %v739, 0.0
    %v836 = vmax.f32 %v742, 0.0
    %v837 = vmax.f32 %v747, 0.0
    %v838 = vmax.f32 %v750, 0.0
    %v839 = vmax.f32 %v755, 0.0
    %v840 = vmax.f32 %v758, 0.0
    %v841 = vmax.f32 %v763, 0.0
    %v842 = vmax.f32 %v766, 0.0
    %v843 = vmax.f32 %v771, 0.0
    %v844 = vmax.f32 %v774, 0.0
    %v845 = vmax.f32 %v779, 0.0
    %v846 = vmax.f32 %v782, 0.0
    %v847 = vmax.f32 %v787, 0.0
    %v848 = vmax.f32 %v790, 0.0
    %v849 = vmax.f32 %v795, 0.0
    %v850 = vmax.f32 %v798, 0.0
    %v851 = vmax.f32 %v803, 0.0
    %v852 = vmax.f32 %v806, 0.0
    %v853 = vmax.f32 %v811, 0.0
    %v854 = vmax.f32 %v814, 0.0
    %v855 = vmax.f32 %v819, 0.0
    %v856 = vmax.f32 %v822, 0.0
    %v857 = vpack.c.bf16 %v826, %v825
    %v858 = vpack.c.bf16 %v828, %v827
    %v859 = vpack.c.bf16 %v830, %v829
    %v860 = vpack.c.bf16 %v832, %v831
    %v861 = vpack.c.bf16 %v834, %v833
    %v862 = vpack.c.bf16 %v836, %v835
    %v863 = vpack.c.bf16 %v838, %v837
    %v864 = vpack.c.bf16 %v840, %v839
    %v865 = vpack.c.bf16 %v842, %v841
    %v866 = vpack.c.bf16 %v844, %v843
    %v867 = vpack.c.bf16 %v846, %v845
    %v868 = vpack.c.bf16 %v848, %v847
    %v869 = vpack.c.bf16 %v850, %v849
    %v870 = vpack.c.bf16 %v852, %v851
    %v871 = vpack.c.bf16 %v854, %v853
    %v872 = vpack.c.bf16 %v856, %v855
    %v889 = vunpack.c.l.b16 %v857
    %v890 = vunpack.c.h.b16 %v857
    %v891 = vunpack.c.l.b16 %v858
    %v892 = vunpack.c.h.b16 %v858
    %v893 = vunpack.c.l.b16 %v859
    %v894 = vunpack.c.h.b16 %v859
    %v895 = vunpack.c.l.b16 %v860
    %v896 = vunpack.c.h.b16 %v860
    %v897 = vunpack.c.l.b16 %v861
    %v898 = vunpack.c.h.b16 %v861
    %v899 = vunpack.c.l.b16 %v862
    %v900 = vunpack.c.h.b16 %v862
    %v901 = vunpack.c.l.b16 %v863
    %v902 = vunpack.c.h.b16 %v863
    %v903 = vunpack.c.l.b16 %v864
    %v904 = vunpack.c.h.b16 %v864
    %v905 = vunpack.c.l.b16 %v865
    %v906 = vunpack.c.h.b16 %v865
    %v907 = vunpack.c.l.b16 %v866
    %v908 = vunpack.c.h.b16 %v866
    %v909 = vunpack.c.l.b16 %v867
    %v910 = vunpack.c.h.b16 %v867
    %v911 = vunpack.c.l.b16 %v868
    %v912 = vunpack.c.h.b16 %v868
    %v913 = vunpack.c.l.b16 %v869
    %v914 = vunpack.c.h.b16 %v869
    %v915 = vunpack.c.l.b16 %v870
    %v916 = vunpack.c.h.b16 %v870
    %v917 = vunpack.c.l.b16 %v871
    %v918 = vunpack.c.h.b16 %v871
    %v919 = vunpack.c.l.b16 %v872
    %v920 = vunpack.c.h.b16 %v872
    %v921 = vpack.c.b16 %v889, %v889
    %v922 = vpack.c.b16 %v890, %v890
    %v923 = vpack.c.b16 %v891, %v891
    %v924 = vpack.c.b16 %v892, %v892
    %v925 = vpack.c.b16 %v893, %v893
    %v926 = vpack.c.b16 %v894, %v894
    %v927 = vpack.c.b16 %v895, %v895
    %v928 = vpack.c.b16 %v896, %v896
    %v929 = vpack.c.b16 %v897, %v897
    %v930 = vpack.c.b16 %v898, %v898
    %v931 = vpack.c.b16 %v899, %v899
    %v932 = vpack.c.b16 %v900, %v900
    %v933 = vpack.c.b16 %v901, %v901
    %v934 = vpack.c.b16 %v902, %v902
    %v935 = vpack.c.b16 %v903, %v903
    %v936 = vpack.c.b16 %v904, %v904
    %v937 = vpack.c.b16 %v905, %v905
    %v938 = vpack.c.b16 %v906, %v906
    %v939 = vpack.c.b16 %v907, %v907
    %v940 = vpack.c.b16 %v908, %v908
    %v941 = vpack.c.b16 %v909, %v909
    %v942 = vpack.c.b16 %v910, %v910
    %v943 = vpack.c.b16 %v911, %v911
    %v944 = vpack.c.b16 %v912, %v912
    %v945 = vpack.c.b16 %v913, %v913
    %v946 = vpack.c.b16 %v914, %v914
    %v947 = vpack.c.b16 %v915, %v915
    %v948 = vpack.c.b16 %v916, %v916
    %v949 = vpack.c.b16 %v917, %v917
    %v950 = vpack.c.b16 %v918, %v918
    %v951 = vpack.c.b16 %v919, %v919
    %v952 = vpack.c.b16 %v920, %v920
    %985 = vst [vmem:[#allocation9] sm:$0xf] %v921
    %986 = vst [vmem:[#allocation9 + $0x4] sm:$0xf] %v922
    %987 = vst [vmem:[#allocation9 + $0x8] sm:$0xf] %v923
    %988 = vst [vmem:[#allocation9 + $0xc] sm:$0xf] %v924
    %989 = vst [vmem:[#allocation9 + $0x10] sm:$0xf] %v925
    %990 = vst [vmem:[#allocation9 + $0x14] sm:$0xf] %v926
    %991 = vst [vmem:[#allocation9 + $0x18] sm:$0xf] %v927
    %992 = vst [vmem:[#allocation9 + $0x1c] sm:$0xf] %v928
    %993 = vst [vmem:[#allocation9 + $0x20] sm:$0xf] %v929
    %994 = vst [vmem:[#allocation9 + $0x24] sm:$0xf] %v930
    %995 = vst [vmem:[#allocation9 + $0x28] sm:$0xf] %v931
    %996 = vst [vmem:[#allocation9 + $0x2c] sm:$0xf] %v932
    %997 = vst [vmem:[#allocation9 + $0x30] sm:$0xf] %v933
    %998 = vst [vmem:[#allocation9 + $0x34] sm:$0xf] %v934
    %999 = vst [vmem:[#allocation9 + $0x38] sm:$0xf] %v935
    %1000 = vst [vmem:[#allocation9 + $0x3c] sm:$0xf] %v936
    %1001 = vst [vmem:[#allocation9 + $0x40] sm:$0xf] %v937
    %1002 = vst [vmem:[#allocation9 + $0x44] sm:$0xf] %v938
    %1003 = vst [vmem:[#allocation9 + $0x48] sm:$0xf] %v939
    %1004 = vst [vmem:[#allocation9 + $0x4c] sm:$0xf] %v940
    %1005 = vst [vmem:[#allocation9 + $0x50] sm:$0xf] %v941
    %1006 = vst [vmem:[#allocation9 + $0x54] sm:$0xf] %v942
    %1007 = vst [vmem:[#allocation9 + $0x58] sm:$0xf] %v943
    %1008 = vst [vmem:[#allocation9 + $0x5c] sm:$0xf] %v944
    %1009 = vst [vmem:[#allocation9 + $0x60] sm:$0xf] %v945
    %1010 = vst [vmem:[#allocation9 + $0x64] sm:$0xf] %v946
    %1011 = vst [vmem:[#allocation9 + $0x68] sm:$0xf] %v947
    %1012 = vst [vmem:[#allocation9 + $0x6c] sm:$0xf] %v948
    %1013 = vst [vmem:[#allocation9 + $0x70] sm:$0xf] %v949
    %1014 = vst [vmem:[#allocation9 + $0x74] sm:$0xf] %v950
    %1015 = vst [vmem:[#allocation9 + $0x78] sm:$0xf] %v951
    %1016 = vst [vmem:[#allocation9 + $0x7c] sm:$0xf] %v952
    // Predicated region
    $region34: #{tpu_custom_call.1} parent=1 // pred_check
      _
    $region35: #{tpu_custom_call.1} parent=1 // pred_check_branch
      %1018 = sbr.rel (0) target = $region37
    $region36: #{tpu_custom_call.1} parent=1 // pred_region
      %s1020 = ssub.s32 2048, 2048
      %1021 = vsyncadd [#allocation5], %s1020
      %s1022 = sshll.u32 [#allocation9], 4
      %s1023 = int_to_ptr.vmem [resolvable:$true] %s1022
      %1028 = dma.vmem_to_hbm [thread:$0]  %s1023, 2048, %s4, [#allocation5], 64, 64, 4
    $region37: #{tpu_custom_call.1} parent=1 // pred_fallthru
      _
    // Predicated region
    $region38: #{tpu_custom_call.1} parent=1 // pred_check
      _
    $region39: #{tpu_custom_call.1} parent=1 // pred_check_branch
      %1030 = sbr.rel (0) target = $region41
    $region40: #{tpu_custom_call.1} parent=1 // pred_region
      %1031 = dma.done [#allocation5], 2048
    $region41: #{tpu_custom_call.1} parent=1 // pred_fallthru
      _
    %1032 = vsyncpa [#allocation4], 1
    %1033 = vsyncpa [#allocation7], 1
    %1034 = vsyncpa [#allocation5], 1

</llo_original>
